<compile_context>
chip_gen: v6e
topology: v6e:2x2x1
jax: 0.10.0
libtpu: 0.0.40
codegen_flags: <defaults>
</compile_context>

<pallas_src>
import functools

import jax
import jax.numpy as jnp
import numpy as np
from jax.experimental import pallas as pl
from jax.experimental.pallas import tpu as pltpu


def _recurrent_kernel(a_ref, x_ref, wx_ref, wh_ref, b_ref, hseq_ref, h_carry,
                      *, tb, n, cp):
    """One grid step = TB serial Elman steps. x_ref is (TB*N, Cin), hseq_ref is (TB*N, Cp)."""
    # Zero hidden state once, before the first timestep of the whole sequence.
    @pl.when(pl.program_id(0) == 0)
    def _():
        h_carry[...] = jnp.zeros_like(h_carry)

    A = a_ref[...]                                      # (N, N)  resident across steps
    wh = wh_ref[...]                                    # (Cp, 2*Cp)
    bias = b_ref[...]                                   # (1, Cp) = b_rel_x + b_rel_h

    # Hoisted x-branch weight matmul for all TB steps of this block (one tall matmul,
    # off the per-step serial dependency chain).
    xw_all = jnp.dot(x_ref[...], wx_ref[...],
                     preferred_element_type=jnp.float32)  # (TB*N, 2*Cp)

    h = h_carry[...]                                    # (N, Cp)
    for t in range(tb):                                 # static unroll over the time block
        xw = xw_all[t * n:(t + 1) * n, :]               # (N, 2*Cp) static, 128-aligned slice
        hw = jnp.dot(h, wh, preferred_element_type=jnp.float32)            # (N, 2*Cp)
        rel = xw[:, :cp] + hw[:, :cp]                   # fuse both rel paths ...
        agg = jnp.dot(A, rel, preferred_element_type=jnp.float32)          # ... one A matmul
        h = jax.nn.sigmoid(agg + xw[:, cp:] + hw[:, cp:] + bias)
        hseq_ref[t * n:(t + 1) * n, :] = h              # full-lane store
    h_carry[...] = h                                    # persists to the next grid step


def _y_kernel(a_ref, h_ref, wy_ref, by_ref, y_ref, *, tb, n, cp):
    """Time-parallel output branch: y_t = sigmoid(GraphConv_y(h_t)) for TB steps."""
    A = a_ref[...]                                      # (N, N)
    by = by_ref[...]                                    # (1, Cp)
    hw_all = jnp.dot(h_ref[...], wy_ref[...],
                     preferred_element_type=jnp.float32)  # (TB*N, 2*Cp), one tall matmul
    for t in range(tb):
        hw = hw_all[t * n:(t + 1) * n, :]
        agg = jnp.dot(A, hw[:, :cp], preferred_element_type=jnp.float32)
        y_ref[t * n:(t + 1) * n, :] = jax.nn.sigmoid(agg + hw[:, cp:] + by)


def gconv_elman_forward(A, X_seq, params, out_channels, *, time_block=4):
    """Runs T fused GConvElman forward calls.

    Returns (y_seq (T, N, Cout), final H (N, Cout))."""
    T, N, Cin = X_seq.shape
    Cout = out_channels
    Cp = ((Cout + 127) // 128) * 128                    # lane-dense padded channel width
    TB = min(time_block, T)
    Tp = pl.cdiv(T, TB) * TB                            # pad T to a multiple of TB
    if Tp != T:
        X_seq = jnp.pad(X_seq, ((0, Tp - T), (0, 0), (0, 0)))

    def pad2(w, rows, cols):
        return jnp.pad(w, ((0, rows - w.shape[0]), (0, cols - w.shape[1])))

    # Concatenate each GraphConv's rel/root weights along the output axis so each branch
    # needs a single fused weight matmul. Zero padding keeps padded lanes inert.
    wx = jnp.concatenate([pad2(params["w_rel_x"], Cin, Cp),
                          pad2(params["w_root_x"], Cin, Cp)], axis=1)        # (Cin, 2*Cp)
    wh = jnp.concatenate([pad2(params["w_rel_h"], Cp, Cp),
                          pad2(params["w_root_h"], Cp, Cp)], axis=1)         # (Cp, 2*Cp)
    wy = jnp.concatenate([pad2(params["w_rel_y"], Cp, Cp),
                          pad2(params["w_root_y"], Cp, Cp)], axis=1)         # (Cp, 2*Cp)
    b_xh = pad2(params["b_rel_x"] + params["b_rel_h"], 1, Cp)                # combined bias
    by = pad2(params["b_rel_y"], 1, Cp)

    # Flatten (time, node) so every kernel block is a 2-D lane-dense slab (no in-kernel reshape).
    x_flat = X_seq.reshape(Tp * N, Cin)

    resident = lambda i: (0, 0)                         # constant index_map -> DMA'd once

    # <= v7x's 64-MiB physical VMEM; can be raised toward ~100 MiB on v5e/v6e when scaling N/TB.
    vmem_limit = 48 * 1024 * 1024

    # ---- Pass 1: serial Elman recurrence (h), TB timesteps per grid step ----
    h_flat = pl.pallas_call(
        functools.partial(_recurrent_kernel, tb=TB, n=N, cp=Cp),
        out_shape=jax.ShapeDtypeStruct((Tp * N, Cp), jnp.float32),
        grid=(Tp // TB,),
        in_specs=[pl.BlockSpec((N, N), resident),                 # A (resident)
                  pl.BlockSpec((TB * N, Cin), lambda i: (i, 0)),  # X block (pipelined)
                  pl.BlockSpec((Cin, 2 * Cp), resident),          # [W_rel_x | W_root_x]
                  pl.BlockSpec((Cp, 2 * Cp), resident),           # [W_rel_h | W_root_h]
                  pl.BlockSpec((1, Cp), resident)],               # b_rel_x + b_rel_h
        out_specs=pl.BlockSpec((TB * N, Cp), lambda i: (i, 0)),   # h block (pipelined)
        scratch_shapes=[pltpu.VMEM((N, Cp), jnp.float32)],        # hidden-state carry
        compiler_params=pltpu.CompilerParams(
            dimension_semantics=("arbitrary",),                   # time recurrence is serial
            vmem_limit_bytes=vmem_limit),
    )(A, x_flat, wx, wh, b_xh)

    # ---- Pass 2: output branch (y), embarrassingly parallel over time ----
    y_flat = pl.pallas_call(
        functools.partial(_y_kernel, tb=TB, n=N, cp=Cp),
        out_shape=jax.ShapeDtypeStruct((Tp * N, Cp), jnp.float32),
        grid=(Tp // TB,),
        in_specs=[pl.BlockSpec((N, N), resident),                 # A (resident)
                  pl.BlockSpec((TB * N, Cp), lambda i: (i, 0)),   # h block (pipelined)
                  pl.BlockSpec((Cp, 2 * Cp), resident),           # [W_rel_y | W_root_y]
                  pl.BlockSpec((1, Cp), resident)],               # b_rel_y
        out_specs=pl.BlockSpec((TB * N, Cp), lambda i: (i, 0)),   # y block (pipelined)
        compiler_params=pltpu.CompilerParams(
            dimension_semantics=("parallel",),                    # can shard across v7x TCs
            vmem_limit_bytes=vmem_limit),
    )(A, h_flat, wy, by)

    y_seq = y_flat.reshape(Tp, N, Cp)[:T, :, :Cout]
    h_final = h_flat[(T - 1) * N:T * N, :Cout]
    return y_seq, h_final


def gconv_elman_reference(A, X_seq, p, out_channels):
    """Pure-JAX reference: T sequential calls of the PyTorch GConvElman module."""
    T, N, _ = X_seq.shape
    H = jnp.zeros((N, out_channels), dtype=jnp.float32)
    ys = []
    for t in range(T):
        X = X_seq[t]
        whx = (A @ X) @ p["w_rel_x"] + p["b_rel_x"] + X @ p["w_root_x"]
        whh = (A @ H) @ p["w_rel_h"] + p["b_rel_h"] + H @ p["w_root_h"]
        H = jax.nn.sigmoid(whx + whh)
        wyv = (A @ H) @ p["w_rel_y"] + p["b_rel_y"] + H @ p["w_root_y"]
        ys.append(jax.nn.sigmoid(wyv))
    return jnp.stack(ys), H


if __name__ == "__main__":
    T = 8             # number of recurrent forward calls fused into one sequence
    N = 16            # number of graph nodes
    IN_CH = 8         # in_channels
    OUT_CH = 32       # out_channels

    key = jax.random.PRNGKey(0)
    keys = jax.random.split(key, 12)

    # Sequence of node-feature matrices (one per forward call).
    X_seq = jax.random.normal(keys[0], (T, N, IN_CH), dtype=jnp.float32)

    # Ring graph with edges in both directions + random edge weights.
    src = jnp.concatenate([jnp.arange(N), (jnp.arange(N) + 1) % N])
    dst = jnp.concatenate([(jnp.arange(N) + 1) % N, jnp.arange(N)])
    edge_index = jnp.stack([src, dst], axis=0)                      # (2, 2N), PyG convention
    edge_weight = jax.random.uniform(keys[1], (edge_index.shape[1],),
                                     dtype=jnp.float32, minval=0.5, maxval=1.5)

    # Glue: densify edge list -> adjacency so 'add' aggregation is A @ Z.
    A = jnp.zeros((N, N), dtype=jnp.float32).at[edge_index[1], edge_index[0]].add(edge_weight)

    # Deterministic synthetic parameters. PyTorch Linear weights are (out, in);
    # stored pre-transposed as (in, out). lin_root has no bias in PyG GraphConv.
    def w(k, shape, fan_in):
        bound = 1.0 / np.sqrt(fan_in)
        return jax.random.uniform(k, shape, dtype=jnp.float32, minval=-bound, maxval=bound)

    params = {
        "w_rel_x":  w(keys[2], (IN_CH, OUT_CH), IN_CH),
        "b_rel_x":  w(keys[3], (1, OUT_CH), IN_CH),
        "w_root_x": w(keys[4], (IN_CH, OUT_CH), IN_CH),
        "w_rel_h":  w(keys[5], (OUT_CH, OUT_CH), OUT_CH),
        "b_rel_h":  w(keys[6], (1, OUT_CH), OUT_CH),
        "w_root_h": w(keys[7], (OUT_CH, OUT_CH), OUT_CH),
        "w_rel_y":  w(keys[8], (OUT_CH, OUT_CH), OUT_CH),
        "b_rel_y":  w(keys[9], (1, OUT_CH), OUT_CH),
        "w_root_y": w(keys[10], (OUT_CH, OUT_CH), OUT_CH),
    }

    y_seq, h_final = gconv_elman_forward(A, X_seq, params, OUT_CH, time_block=4)
    y_seq = jax.block_until_ready(y_seq)
    h_final = jax.block_until_ready(h_final)

    y_ref, h_ref = gconv_elman_reference(A, X_seq, params, OUT_CH)
    np.testing.assert_allclose(np.asarray(y_seq), np.asarray(y_ref), rtol=1e-5, atol=1e-5)
    np.testing.assert_allclose(np.asarray(h_final), np.asarray(h_ref), rtol=1e-5, atol=1e-5)

    print("KERNEL_OK")
</pallas_src>

<mosaic_0001>
module attributes {stable_mosaic.version = 11 : i64} {
  func.func @_recurrent_kernel(%arg0: i32, %arg1: memref<16x16xf32, #tpu.memory_space<vmem>>, %arg2: memref<64x8xf32, #tpu.memory_space<vmem>>, %arg3: memref<8x256xf32, #tpu.memory_space<vmem>>, %arg4: memref<128x256xf32, #tpu.memory_space<vmem>>, %arg5: memref<1x128xf32, #tpu.memory_space<vmem>>, %arg6: memref<64x128xf32, #tpu.memory_space<vmem>>, %arg7: memref<16x128xf32, #tpu.memory_space<vmem>>) attributes {dimension_semantics = [#tpu.dimension_semantics<arbitrary>], iteration_bounds = array<i64: 2>, scalar_prefetch = 0 : i64, scratch_operands = 1 : i64, tpu.core_type = #tpu.core_type<tc>, window_params = [{pipeline_mode = #tpu.pipeline_mode<synchronous>, transform_indices = @transform_0, window_bounds = array<i64: 16, 16>}, {transform_indices = @transform_1, window_bounds = array<i64: 64, 8>}, {pipeline_mode = #tpu.pipeline_mode<synchronous>, transform_indices = @transform_2, window_bounds = array<i64: 8, 256>}, {pipeline_mode = #tpu.pipeline_mode<synchronous>, transform_indices = @transform_3, window_bounds = array<i64: 128, 256>}, {pipeline_mode = #tpu.pipeline_mode<synchronous>, transform_indices = @transform_4, window_bounds = array<i64: 1, 128>}, {transform_indices = @transform_5, window_bounds = array<i64: 64, 128>}]} {
    %c0_i32 = arith.constant 0 : i32
    %0 = arith.cmpi eq, %arg0, %c0_i32 : i32
    %1 = arith.extui %0 : i1 to i32
    %c0_i32_0 = arith.constant 0 : i32
    %2 = arith.cmpi ne, %1, %c0_i32_0 : i32
    scf.if %2 {
      %cst_31 = arith.constant 0.000000e+00 : f32
      %83 = vector.broadcast %cst_31 : f32 to vector<16x128xf32>
      %c0_32 = arith.constant 0 : index
      %c0_33 = arith.constant 0 : index
      %84 = vector.load %arg7[%c0_32, %c0_33] : memref<16x128xf32, #tpu.memory_space<vmem>>, vector<16x128xf32>
      tpu.vector_store %arg7[%c0_32, %c0_33], %83 {strides = array<i32>} : memref<16x128xf32, #tpu.memory_space<vmem>>, vector<16x128xf32>,
    } else {
    }
    %c0 = arith.constant 0 : index
    %c0_1 = arith.constant 0 : index
    %3 = vector.load %arg1[%c0, %c0_1] : memref<16x16xf32, #tpu.memory_space<vmem>>, vector<16x16xf32>
    %c0_2 = arith.constant 0 : index
    %c0_3 = arith.constant 0 : index
    %4 = vector.load %arg4[%c0_2, %c0_3] : memref<128x256xf32, #tpu.memory_space<vmem>>, vector<128x256xf32>
    %c0_4 = arith.constant 0 : index
    %c0_5 = arith.constant 0 : index
    %5 = vector.load %arg5[%c0_4, %c0_5] : memref<1x128xf32, #tpu.memory_space<vmem>>, vector<1x128xf32>
    %c0_6 = arith.constant 0 : index
    %c0_7 = arith.constant 0 : index
    %6 = vector.load %arg2[%c0_6, %c0_7] : memref<64x8xf32, #tpu.memory_space<vmem>>, vector<64x8xf32>
    %c0_8 = arith.constant 0 : index
    %c0_9 = arith.constant 0 : index
    %7 = vector.load %arg3[%c0_8, %c0_9] : memref<8x256xf32, #tpu.memory_space<vmem>>, vector<8x256xf32>
    %cst = arith.constant dense<0.000000e+00> : vector<64x256xf32>
    %8 = tpu.matmul %6, %7, %cst {dimension_numbers = #tpu.dot_dimension_numbers<[1], [0], [0], [1], [0, 0, 1, 1], [], []>} : vector<64x8xf32>, vector<8x256xf32>, vector<64x256xf32> -> vector<64x256xf32>
    %c0_10 = arith.constant 0 : index
    %c0_11 = arith.constant 0 : index
    %9 = vector.load %arg7[%c0_10, %c0_11] : memref<16x128xf32, #tpu.memory_space<vmem>>, vector<16x128xf32>
    %10 = vector.extract_strided_slice %8 {offsets = [0, 0], sizes = [16, 256], strides = [1, 1]} : vector<64x256xf32> to vector<16x256xf32>
    %cst_12 = arith.constant dense<0.000000e+00> : vector<16x256xf32>
    %11 = tpu.matmul %9, %4, %cst_12 {dimension_numbers = #tpu.dot_dimension_numbers<[1], [0], [0], [1], [0, 0, 1, 1], [], []>} : vector<16x128xf32>, vector<128x256xf32>, vector<16x256xf32> -> vector<16x256xf32>
    %12 = vector.extract_strided_slice %10 {offsets = [0, 0], sizes = [16, 128], strides = [1, 1]} : vector<16x256xf32> to vector<16x128xf32>
    %13 = vector.extract_strided_slice %11 {offsets = [0, 0], sizes = [16, 128], strides = [1, 1]} : vector<16x256xf32> to vector<16x128xf32>
    %14 = arith.addf %12, %13 : vector<16x128xf32>
    %cst_13 = arith.constant dense<0.000000e+00> : vector<16x128xf32>
    %15 = tpu.matmul %3, %14, %cst_13 {dimension_numbers = #tpu.dot_dimension_numbers<[1], [0], [0], [1], [0, 0, 1, 1], [], []>} : vector<16x16xf32>, vector<16x128xf32>, vector<16x128xf32> -> vector<16x128xf32>
    %16 = vector.extract_strided_slice %10 {offsets = [0, 128], sizes = [16, 128], strides = [1, 1]} : vector<16x256xf32> to vector<16x128xf32>
    %17 = arith.addf %15, %16 : vector<16x128xf32>
    %18 = vector.extract_strided_slice %11 {offsets = [0, 128], sizes = [16, 128], strides = [1, 1]} : vector<16x256xf32> to vector<16x128xf32>
    %19 = arith.addf %17, %18 : vector<16x128xf32>
    %20 = vector.broadcast %5 : vector<1x128xf32> to vector<16x128xf32>
    %21 = arith.addf %19, %20 : vector<16x128xf32>
    %22 = arith.negf %21 : vector<16x128xf32>
    %23 = math.exp %22 : vector<16x128xf32>
    %cst_14 = arith.constant 1.000000e+00 : f32
    %24 = vector.broadcast %cst_14 : f32 to vector<16x128xf32>
    %25 = arith.addf %24, %23 : vector<16x128xf32>
    %26 = arith.divf %24, %25 : vector<16x128xf32>
    %c0_15 = arith.constant 0 : index
    %c0_16 = arith.constant 0 : index
    %27 = vector.load %arg6[%c0_15, %c0_16] : memref<64x128xf32, #tpu.memory_space<vmem>>, vector<16x128xf32>
    tpu.vector_store %arg6[%c0_15, %c0_16], %26 {strides = array<i32>} : memref<64x128xf32, #tpu.memory_space<vmem>>, vector<16x128xf32>,
    %28 = vector.extract_strided_slice %8 {offsets = [16, 0], sizes = [16, 256], strides = [1, 1]} : vector<64x256xf32> to vector<16x256xf32>
    %cst_17 = arith.constant dense<0.000000e+00> : vector<16x256xf32>
    %29 = tpu.matmul %26, %4, %cst_17 {dimension_numbers = #tpu.dot_dimension_numbers<[1], [0], [0], [1], [0, 0, 1, 1], [], []>} : vector<16x128xf32>, vector<128x256xf32>, vector<16x256xf32> -> vector<16x256xf32>
    %30 = vector.extract_strided_slice %28 {offsets = [0, 0], sizes = [16, 128], strides = [1, 1]} : vector<16x256xf32> to vector<16x128xf32>
    %31 = vector.extract_strided_slice %29 {offsets = [0, 0], sizes = [16, 128], strides = [1, 1]} : vector<16x256xf32> to vector<16x128xf32>
    %32 = arith.addf %30, %31 : vector<16x128xf32>
    %cst_18 = arith.constant dense<0.000000e+00> : vector<16x128xf32>
    %33 = tpu.matmul %3, %32, %cst_18 {dimension_numbers = #tpu.dot_dimension_numbers<[1], [0], [0], [1], [0, 0, 1, 1], [], []>} : vector<16x16xf32>, vector<16x128xf32>, vector<16x128xf32> -> vector<16x128xf32>
    %34 = vector.extract_strided_slice %28 {offsets = [0, 128], sizes = [16, 128], strides = [1, 1]} : vector<16x256xf32> to vector<16x128xf32>
    %35 = arith.addf %33, %34 : vector<16x128xf32>
    %36 = vector.extract_strided_slice %29 {offsets = [0, 128], sizes = [16, 128], strides = [1, 1]} : vector<16x256xf32> to vector<16x128xf32>
    %37 = arith.addf %35, %36 : vector<16x128xf32>
    %38 = vector.broadcast %5 : vector<1x128xf32> to vector<16x128xf32>
    %39 = arith.addf %37, %38 : vector<16x128xf32>
    %40 = arith.negf %39 : vector<16x128xf32>
    %41 = math.exp %40 : vector<16x128xf32>
    %cst_19 = arith.constant 1.000000e+00 : f32
    %42 = vector.broadcast %cst_19 : f32 to vector<16x128xf32>
    %43 = arith.addf %42, %41 : vector<16x128xf32>
    %44 = arith.divf %42, %43 : vector<16x128xf32>
    %c16 = arith.constant 16 : index
    %c0_20 = arith.constant 0 : index
    %45 = vector.load %arg6[%c16, %c0_20] : memref<64x128xf32, #tpu.memory_space<vmem>>, vector<16x128xf32>
    tpu.vector_store %arg6[%c16, %c0_20], %44 {strides = array<i32>} : memref<64x128xf32, #tpu.memory_space<vmem>>, vector<16x128xf32>,
    %46 = vector.extract_strided_slice %8 {offsets = [32, 0], sizes = [16, 256], strides = [1, 1]} : vector<64x256xf32> to vector<16x256xf32>
    %cst_21 = arith.constant dense<0.000000e+00> : vector<16x256xf32>
    %47 = tpu.matmul %44, %4, %cst_21 {dimension_numbers = #tpu.dot_dimension_numbers<[1], [0], [0], [1], [0, 0, 1, 1], [], []>} : vector<16x128xf32>, vector<128x256xf32>, vector<16x256xf32> -> vector<16x256xf32>
    %48 = vector.extract_strided_slice %46 {offsets = [0, 0], sizes = [16, 128], strides = [1, 1]} : vector<16x256xf32> to vector<16x128xf32>
    %49 = vector.extract_strided_slice %47 {offsets = [0, 0], sizes = [16, 128], strides = [1, 1]} : vector<16x256xf32> to vector<16x128xf32>
    %50 = arith.addf %48, %49 : vector<16x128xf32>
    %cst_22 = arith.constant dense<0.000000e+00> : vector<16x128xf32>
    %51 = tpu.matmul %3, %50, %cst_22 {dimension_numbers = #tpu.dot_dimension_numbers<[1], [0], [0], [1], [0, 0, 1, 1], [], []>} : vector<16x16xf32>, vector<16x128xf32>, vector<16x128xf32> -> vector<16x128xf32>
    %52 = vector.extract_strided_slice %46 {offsets = [0, 128], sizes = [16, 128], strides = [1, 1]} : vector<16x256xf32> to vector<16x128xf32>
    %53 = arith.addf %51, %52 : vector<16x128xf32>
    %54 = vector.extract_strided_slice %47 {offsets = [0, 128], sizes = [16, 128], strides = [1, 1]} : vector<16x256xf32> to vector<16x128xf32>
    %55 = arith.addf %53, %54 : vector<16x128xf32>
    %56 = vector.broadcast %5 : vector<1x128xf32> to vector<16x128xf32>
    %57 = arith.addf %55, %56 : vector<16x128xf32>
    %58 = arith.negf %57 : vector<16x128xf32>
    %59 = math.exp %58 : vector<16x128xf32>
    %cst_23 = arith.constant 1.000000e+00 : f32
    %60 = vector.broadcast %cst_23 : f32 to vector<16x128xf32>
    %61 = arith.addf %60, %59 : vector<16x128xf32>
    %62 = arith.divf %60, %61 : vector<16x128xf32>
    %c32 = arith.constant 32 : index
    %c0_24 = arith.constant 0 : index
    %63 = vector.load %arg6[%c32, %c0_24] : memref<64x128xf32, #tpu.memory_space<vmem>>, vector<16x128xf32>
    tpu.vector_store %arg6[%c32, %c0_24], %62 {strides = array<i32>} : memref<64x128xf32, #tpu.memory_space<vmem>>, vector<16x128xf32>,
    %64 = vector.extract_strided_slice %8 {offsets = [48, 0], sizes = [16, 256], strides = [1, 1]} : vector<64x256xf32> to vector<16x256xf32>
    %cst_25 = arith.constant dense<0.000000e+00> : vector<16x256xf32>
    %65 = tpu.matmul %62, %4, %cst_25 {dimension_numbers = #tpu.dot_dimension_numbers<[1], [0], [0], [1], [0, 0, 1, 1], [], []>} : vector<16x128xf32>, vector<128x256xf32>, vector<16x256xf32> -> vector<16x256xf32>
    %66 = vector.extract_strided_slice %64 {offsets = [0, 0], sizes = [16, 128], strides = [1, 1]} : vector<16x256xf32> to vector<16x128xf32>
    %67 = vector.extract_strided_slice %65 {offsets = [0, 0], sizes = [16, 128], strides = [1, 1]} : vector<16x256xf32> to vector<16x128xf32>
    %68 = arith.addf %66, %67 : vector<16x128xf32>
    %cst_26 = arith.constant dense<0.000000e+00> : vector<16x128xf32>
    %69 = tpu.matmul %3, %68, %cst_26 {dimension_numbers = #tpu.dot_dimension_numbers<[1], [0], [0], [1], [0, 0, 1, 1], [], []>} : vector<16x16xf32>, vector<16x128xf32>, vector<16x128xf32> -> vector<16x128xf32>
    %70 = vector.extract_strided_slice %64 {offsets = [0, 128], sizes = [16, 128], strides = [1, 1]} : vector<16x256xf32> to vector<16x128xf32>
    %71 = arith.addf %69, %70 : vector<16x128xf32>
    %72 = vector.extract_strided_slice %65 {offsets = [0, 128], sizes = [16, 128], strides = [1, 1]} : vector<16x256xf32> to vector<16x128xf32>
    %73 = arith.addf %71, %72 : vector<16x128xf32>
    %74 = vector.broadcast %5 : vector<1x128xf32> to vector<16x128xf32>
    %75 = arith.addf %73, %74 : vector<16x128xf32>
    %76 = arith.negf %75 : vector<16x128xf32>
    %77 = math.exp %76 : vector<16x128xf32>
    %cst_27 = arith.constant 1.000000e+00 : f32
    %78 = vector.broadcast %cst_27 : f32 to vector<16x128xf32>
    %79 = arith.addf %78, %77 : vector<16x128xf32>
    %80 = arith.divf %78, %79 : vector<16x128xf32>
    %c48 = arith.constant 48 : index
    %c0_28 = arith.constant 0 : index
    %81 = vector.load %arg6[%c48, %c0_28] : memref<64x128xf32, #tpu.memory_space<vmem>>, vector<16x128xf32>
    tpu.vector_store %arg6[%c48, %c0_28], %80 {strides = array<i32>} : memref<64x128xf32, #tpu.memory_space<vmem>>, vector<16x128xf32>,
    %c0_29 = arith.constant 0 : index
    %c0_30 = arith.constant 0 : index
    %82 = vector.load %arg7[%c0_29, %c0_30] : memref<16x128xf32, #tpu.memory_space<vmem>>, vector<16x128xf32>
    tpu.vector_store %arg7[%c0_29, %c0_30], %80 {strides = array<i32>} : memref<16x128xf32, #tpu.memory_space<vmem>>, vector<16x128xf32>,
    return
  }
  func.func @transform_0(%arg0: i32) -> (i32, i32) {
    %c0_i32 = arith.constant 0 : i32
    %c0_i32_0 = arith.constant 0 : i32
    %c0_i32_1 = arith.constant 0 : i32
    return %c0_i32, %c0_i32_0 : i32, i32
  }
  func.func @transform_1(%arg0: i32) -> (i32, i32) {
    %c0_i32 = arith.constant 0 : i32
    %c0_i32_0 = arith.constant 0 : i32
    return %arg0, %c0_i32 : i32, i32
  }
  func.func @transform_2(%arg0: i32) -> (i32, i32) {
    %c0_i32 = arith.constant 0 : i32
    %c0_i32_0 = arith.constant 0 : i32
    %c0_i32_1 = arith.constant 0 : i32
    return %c0_i32, %c0_i32_0 : i32, i32
  }
  func.func @transform_3(%arg0: i32) -> (i32, i32) {
    %c0_i32 = arith.constant 0 : i32
    %c0_i32_0 = arith.constant 0 : i32
    %c0_i32_1 = arith.constant 0 : i32
    return %c0_i32, %c0_i32_0 : i32, i32
  }
  func.func @transform_4(%arg0: i32) -> (i32, i32) {
    %c0_i32 = arith.constant 0 : i32
    %c0_i32_0 = arith.constant 0 : i32
    %c0_i32_1 = arith.constant 0 : i32
    return %c0_i32, %c0_i32_0 : i32, i32
  }
  func.func @transform_5(%arg0: i32) -> (i32, i32) {
    %c0_i32 = arith.constant 0 : i32
    %c0_i32_0 = arith.constant 0 : i32
    return %arg0, %c0_i32 : i32, i32
  }
}

</mosaic_0001>

<llo_original>
// kernel: tpu_custom_call.1
$region0: #{tpu_custom_call.1}
  #allocation0 [shape = 'u32[]', space=smem, size = 0x4, offset = 0x4, fixed_abs, tag = 'smem constant byte address 0x4 - core index']
  #allocation1 [shape = 'u32[144,128]{1,0:T(1,128)}', space=vmem, size = 0x12000, scoped, tag = 'internal scratch']
  #allocation2 [shape = 'f32[16,128]{1,0:T(8,128)}', space=vmem, size = 0x2000, scoped, tag = 'scratch operand']
  %s0 = inlined_call_operand.vmem [shape: f32[16,16], index: 0, kind: input, shape index: {}]
  %s1 = inlined_call_operand.vmem [shape: f32[128,8], index: 1, kind: input, shape index: {}]
  %s2 = inlined_call_operand.vmem [shape: f32[8,256], index: 2, kind: input, shape index: {}]
  %s3 = inlined_call_operand.hbm [shape: f32[128,256], index: 3, kind: input, shape index: {}]
  %s4 = inlined_call_operand.vmem [shape: f32[1,128], index: 4, kind: input, shape index: {}]
  %s5 = inlined_call_operand.hbm [shape: f32[128,128], index: 5, kind: output, shape index: {}]
  %s6 = sld [smem:[#allocation0]]
  $region61: #{tpu_custom_call.1} parent=0
    _
  %s8 = ssub.s32 1, %s6
  %s9 = scalar_select 0, %s8, %s6
  $region1: #{tpu_custom_call.1} parent=0
    #allocation3 [shape = 'u8[131072]{0}', space=vmem, size = 0x20000, scoped, tag = 'input window, operand 3, single buffered']
    #allocation4 [shape = 's32[2]{0}', space=sflag, size = 0x8, scoped, tag = 'scoped memory for tpu_custom_call.1']
    #allocation5 [shape = 's32[2]{0}', space=sflag, size = 0x8, scoped, tag = 'scoped memory for tpu_custom_call.1']
    #allocation6 [shape = 'u8[65536]{0}', space=vmem, size = 0x10000, scoped, tag = 'output window, operand 0']
    %10 = vsyncpa [#allocation4], 0
    %11 = vsyncpa [#allocation5], 0
    %s12 = scalar_lea.sflag [#allocation5], 1
    %13 = vsyncpa %s12, 0
    loop: start=0, step=1, limit=4
    $region2: #{tpu_custom_call.1} parent=1 // loop_pre_header
      _
    $region3: #{tpu_custom_call.1} parent=1 // loop_header
      %s15 = sphi 0, %s19
      %p16 = scmp.ge.s32.totalorder %s15, 4
      %s23 = sphi 0, %s23
      %s25 = sphi 0, %s23
      %s26 = sphi 0, %s25
      %s40 = sphi 0, %s26
      %s46 = sphi 0, %s48
      %s49 = sphi 0, %s46
      %s50 = sphi 0, %s49
      %s66 = sphi 0, %s50
      %s70 = sphi 0, %s70
      %s72 = sphi 0, %s70
      %s73 = sphi 0, %s72
      %s87 = sphi 0, %s73
      %s91 = sphi 0, %s91
      %s93 = sphi 0, %s91
      %s94 = sphi 0, %s93
      %s108 = sphi 0, %s94
      %s112 = sphi 0, %s112
      %s114 = sphi 0, %s112
      %s115 = sphi 0, %s114
      %s129 = sphi 0, %s115
      %s135 = sphi 0, %s137
      %s138 = sphi 0, %s135
      %s139 = sphi 0, %s138
      %s155 = sphi 0, %s139
    $region4: #{tpu_custom_call.1} parent=1 // loop_header_branch
      %18 = sbr.rel (%p16) target = $region8
    $region5: #{tpu_custom_call.1} parent=1 // loop_body
      %s20 = ssub.s32 %s15, 1
      %s21 = ssub.s32 %s15, 2
      %s22 = sadd.s32 %s15, 1
      %s24 = sadd.s32 %s23, 1
      %p27 = scmp.eq.s32.totalorder %s15, 1
      %p28 = scmp.ne.s32.totalorder %s23, %s25
      %p29 = scmp.eq.s32.totalorder %s15, 0
      %p30 = por %p28, %p29
      %p31 = scmp.ne.s32.totalorder %s23, %s25
      %p32 = scmp.eq.s32.totalorder %s20, 1
      %p33 = por %p31, %p32
      %p34 = scmp.ne.s32.totalorder %s25, %s26
      %p35 = scmp.eq.s32.totalorder %s20, 0
      %p36 = por %p34, %p35
      %p37 = scmp.ne.s32.totalorder %s25, %s26
      %p38 = scmp.eq.s32.totalorder %s21, 1
      %p39 = por %p37, %p38
      %p41 = scmp.ne.s32.totalorder %s26, %s40
      %p42 = scmp.eq.s32.totalorder %s21, 0
      %p43 = por %p41, %p42
      %s44 = ssub.s32 %s15, %s22
      %p45 = scmp.eq.s32.totalorder %s44, 0
      %s47 = sadd.s32 %s46, 1
      %s48 = scalar_select %p45, %s46, %s47
      %p51 = pneg %p45
      %p52 = scmp.eq.s32.totalorder %s15, 1
      %p53 = por %p51, %p52
      %p54 = scmp.ne.s32.totalorder %s46, %s49
      %p55 = scmp.eq.s32.totalorder %s15, 0
      %p56 = por %p54, %p55
      %p57 = scmp.ne.s32.totalorder %s46, %s49
      %p58 = scmp.eq.s32.totalorder %s20, 1
      %p59 = por %p57, %p58
      %p60 = scmp.ne.s32.totalorder %s49, %s50
      %p61 = scmp.eq.s32.totalorder %s20, 0
      %p62 = por %p60, %p61
      %p63 = scmp.ne.s32.totalorder %s49, %s50
      %p64 = scmp.eq.s32.totalorder %s21, 1
      %p65 = por %p63, %p64
      %p67 = scmp.ne.s32.totalorder %s50, %s66
      %p68 = scmp.eq.s32.totalorder %s21, 0
      %p69 = por %p67, %p68
      %s71 = sadd.s32 %s70, 1
      %p74 = scmp.eq.s32.totalorder %s15, 1
      %p75 = scmp.ne.s32.totalorder %s70, %s72
      %p76 = scmp.eq.s32.totalorder %s15, 0
      %p77 = por %p75, %p76
      %p78 = scmp.ne.s32.totalorder %s70, %s72
      %p79 = scmp.eq.s32.totalorder %s20, 1
      %p80 = por %p78, %p79
      %p81 = scmp.ne.s32.totalorder %s72, %s73
      %p82 = scmp.eq.s32.totalorder %s20, 0
      %p83 = por %p81, %p82
      %p84 = scmp.ne.s32.totalorder %s72, %s73
      %p85 = scmp.eq.s32.totalorder %s21, 1
      %p86 = por %p84, %p85
      %p88 = scmp.ne.s32.totalorder %s73, %s87
      %p89 = scmp.eq.s32.totalorder %s21, 0
      %p90 = por %p88, %p89
      %s92 = sadd.s32 %s91, 1
      %p95 = scmp.eq.s32.totalorder %s15, 1
      %p96 = scmp.ne.s32.totalorder %s91, %s93
      %p97 = scmp.eq.s32.totalorder %s15, 0
      %p98 = por %p96, %p97
      %p99 = scmp.ne.s32.totalorder %s91, %s93
      %p100 = scmp.eq.s32.totalorder %s20, 1
      %p101 = por %p99, %p100
      %p102 = scmp.ne.s32.totalorder %s93, %s94
      %p103 = scmp.eq.s32.totalorder %s20, 0
      %p104 = por %p102, %p103
      %p105 = scmp.ne.s32.totalorder %s93, %s94
      %p106 = scmp.eq.s32.totalorder %s21, 1
      %p107 = por %p105, %p106
      %p109 = scmp.ne.s32.totalorder %s94, %s108
      %p110 = scmp.eq.s32.totalorder %s21, 0
      %p111 = por %p109, %p110
      %s113 = sadd.s32 %s112, 1
      %p116 = scmp.eq.s32.totalorder %s15, 1
      %p117 = scmp.ne.s32.totalorder %s112, %s114
      %p118 = scmp.eq.s32.totalorder %s15, 0
      %p119 = por %p117, %p118
      %p120 = scmp.ne.s32.totalorder %s112, %s114
      %p121 = scmp.eq.s32.totalorder %s20, 1
      %p122 = por %p120, %p121
      %p123 = scmp.ne.s32.totalorder %s114, %s115
      %p124 = scmp.eq.s32.totalorder %s20, 0
      %p125 = por %p123, %p124
      %p126 = scmp.ne.s32.totalorder %s114, %s115
      %p127 = scmp.eq.s32.totalorder %s21, 1
      %p128 = por %p126, %p127
      %p130 = scmp.ne.s32.totalorder %s115, %s129
      %p131 = scmp.eq.s32.totalorder %s21, 0
      %p132 = por %p130, %p131
      %s133 = ssub.s32 %s15, %s22
      %p134 = scmp.eq.s32.totalorder %s133, 0
      %s136 = sadd.s32 %s135, 1
      %s137 = scalar_select %p134, %s135, %s136
      %p140 = pneg %p134
      %p141 = scmp.eq.s32.totalorder %s15, 1
      %p142 = por %p140, %p141
      %p143 = scmp.ne.s32.totalorder %s135, %s138
      %p144 = scmp.eq.s32.totalorder %s15, 0
      %p145 = por %p143, %p144
      %p146 = scmp.ne.s32.totalorder %s135, %s138
      %p147 = scmp.eq.s32.totalorder %s20, 1
      %p148 = por %p146, %p147
      %p149 = scmp.ne.s32.totalorder %s138, %s139
      %p150 = scmp.eq.s32.totalorder %s20, 0
      %p151 = por %p149, %p150
      %p152 = scmp.ne.s32.totalorder %s138, %s139
      %p153 = scmp.eq.s32.totalorder %s21, 1
      %p154 = por %p152, %p153
      %p156 = scmp.ne.s32.totalorder %s139, %s155
      %p157 = scmp.eq.s32.totalorder %s21, 0
      %p158 = por %p156, %p157
      %p159 = scmp.le.s32.totalorder 1, %s15
      %p160 = scmp.lt.s32.totalorder %s15, 3
      %p161 = pnand %p159, %p160
      %p162 = pneg %p161
      // Predicated region
      $region9: #{tpu_custom_call.1} parent=5 // pred_check
        _
      $region10: #{tpu_custom_call.1} parent=5 // pred_check_branch
        %164 = sbr.rel (%p161) target = $region12
      $region11: #{tpu_custom_call.1} parent=5 // pred_region
        %s165 = ssub.s32 %s15, 1
        // Predicated region
        $region13: #{tpu_custom_call.1} parent=11 // pred_check
          %p166 = pneg %p36
        $region14: #{tpu_custom_call.1} parent=11 // pred_check_branch
          %168 = sbr.rel (%p166) target = $region16
        $region15: #{tpu_custom_call.1} parent=11 // pred_region
          _
        $region16: #{tpu_custom_call.1} parent=11 // pred_fallthru
          _
        // Predicated region
        $region17: #{tpu_custom_call.1} parent=11 // pred_check
          %p169 = pneg %p83
        $region18: #{tpu_custom_call.1} parent=11 // pred_check_branch
          %171 = sbr.rel (%p169) target = $region20
        $region19: #{tpu_custom_call.1} parent=11 // pred_region
          _
        $region20: #{tpu_custom_call.1} parent=11 // pred_fallthru
          _
        // Predicated region
        $region21: #{tpu_custom_call.1} parent=11 // pred_check
          %p172 = pneg %p104
        $region22: #{tpu_custom_call.1} parent=11 // pred_check_branch
          %174 = sbr.rel (%p172) target = $region24
        $region23: #{tpu_custom_call.1} parent=11 // pred_region
          %s176 = ssub.s32 4096, 4096
          %177 = vsyncadd [#allocation4], %s176
          %s178 = sshll.u32 [#allocation3], 4
          %s179 = int_to_ptr.vmem [resolvable:$true] %s178
          %184 = dma.hbm_to_vmem [thread:$0]  %s3, 4096, %s179, [#allocation4], 256, 256, 16
        $region24: #{tpu_custom_call.1} parent=11 // pred_fallthru
          _
        // Predicated region
        $region25: #{tpu_custom_call.1} parent=11 // pred_check
          %p185 = pneg %p125
        $region26: #{tpu_custom_call.1} parent=11 // pred_check_branch
          %187 = sbr.rel (%p185) target = $region28
        $region27: #{tpu_custom_call.1} parent=11 // pred_region
          _
        $region28: #{tpu_custom_call.1} parent=11 // pred_fallthru
          _
      $region12: #{tpu_custom_call.1} parent=5 // pred_fallthru
        _
      %p188 = scmp.lt.s32.totalorder %s15, 2
      // Predicated region
      $region29: #{tpu_custom_call.1} parent=5 // pred_check
        %p189 = pneg %p188
      $region30: #{tpu_custom_call.1} parent=5 // pred_check_branch
        %191 = sbr.rel (%p189) target = $region32
      $region31: #{tpu_custom_call.1} parent=5 // pred_region
        // Predicated region
        $region33: #{tpu_custom_call.1} parent=31 // pred_check
          %p192 = pneg %p56
        $region34: #{tpu_custom_call.1} parent=31 // pred_check_branch
          %194 = sbr.rel (%p192) target = $region36
        $region35: #{tpu_custom_call.1} parent=31 // pred_region
          %s195 = smul.u32 8, %s15
          %p196 = scmp.lt.s32.totalorder %s195, 15
          %s197 = scalar_select %p196, %s195, 15
          %s198 = smul.addr %s197, 8
          %s199 = scalar_lea.vmem %s1, %s198
          %s200 = smul.u32 8, %s15
        $region36: #{tpu_custom_call.1} parent=31 // pred_fallthru
          _
      $region32: #{tpu_custom_call.1} parent=5 // pred_fallthru
        _
      %p201 = scmp.le.s32.totalorder 1, %s15
      %p202 = scmp.lt.s32.totalorder %s15, 3
      %p203 = pnand %p201, %p202
      %p204 = pneg %p203
      // Predicated region
      $region37: #{tpu_custom_call.1} parent=5 // pred_check
        _
      $region38: #{tpu_custom_call.1} parent=5 // pred_check_branch
        %206 = sbr.rel (%p203) target = $region40
      $region39: #{tpu_custom_call.1} parent=5 // pred_region
        %s207 = ssub.s32 %s15, 1
        // Predicated region
        $region41: #{tpu_custom_call.1} parent=39 // pred_check
          %p208 = pneg %p104
        $region42: #{tpu_custom_call.1} parent=39 // pred_check_branch
          %210 = sbr.rel (%p208) target = $region44
        $region43: #{tpu_custom_call.1} parent=39 // pred_region
          %211 = dma.done [#allocation4], 4096
        $region44: #{tpu_custom_call.1} parent=39 // pred_fallthru
          _
        %p212 = pneg %p36
        %p213 = pneg %p33
        %s214 = smul.u32 8, %s20
        %p215 = scmp.lt.s32.totalorder %s214, 15
        %s216 = scalar_select %p215, %s214, 15
        %s217 = smul.addr %s216, 8
        %s218 = scalar_lea.vmem %s1, %s217
        %p219 = pneg %p62
        %p220 = pneg %p59
        %p221 = pneg %p83
        %p222 = pneg %p80
        %p223 = pneg %p104
        %p224 = pneg %p101
        %p225 = pneg %p125
        %p226 = pneg %p122
        %p227 = pneg %p151
        %p228 = pneg %p148
        %s229 = sand.u32 %s138, 1
        %s230 = scalar_lea.sflag [#allocation5], %s229
        %s231 = sand.u32 %s138, 1
        %s232 = smul.addr %s231, 64
        %s233 = scalar_lea.vmem [#allocation6], %s232
        %s234 = smul.u32 8, %s20
        %p235 = scmp.lt.s32.totalorder %s234, 15
        %s236 = scalar_select %p235, %s234, 15
        %s237 = smul.addr %s236, 8
        %s238 = scalar_lea.vmem %s1, %s237
        %s239 = smul.u32 8, %s20
        %s240 = smul.u32 8, %s20
        %p241 = scmp.eq.s32.totalorder %s20, 0
        // Predicated region
        $region45: #{tpu_custom_call.1} parent=39 // pred_check
          %p242 = pneg %p241
        $region46: #{tpu_custom_call.1} parent=39 // pred_check_branch
          %244 = sbr.rel (%p242) target = $region48
        $region47: #{tpu_custom_call.1} parent=39 // pred_region
          %245 = vst [vmem:[#allocation2] sm:$0xff] 0.0
          %246 = vst [vmem:[#allocation2 + $0x8] sm:$0xff] 0.0
        $region48: #{tpu_custom_call.1} parent=39 // pred_fallthru
          _
        %v247 = vld [vmem:[%s0] sm:$0xff]
        %v248 = vld [vmem:[%s0 + $0x8] sm:$0xff]
        %v249 = vld [vmem:[#allocation3] sm:$0xff]
        %v250 = vld [vmem:[#allocation3 + $0x8] sm:$0xff]
        %v251 = vld [vmem:[#allocation3 + $0x10] sm:$0xff]
        %v252 = vld [vmem:[#allocation3 + $0x18] sm:$0xff]
        %v253 = vld [vmem:[#allocation3 + $0x20] sm:$0xff]
        %v254 = vld [vmem:[#allocation3 + $0x28] sm:$0xff]
        %v255 = vld [vmem:[#allocation3 + $0x30] sm:$0xff]
        %v256 = vld [vmem:[#allocation3 + $0x38] sm:$0xff]
        %v257 = vld [vmem:[#allocation3 + $0x40] sm:$0xff]
        %v258 = vld [vmem:[#allocation3 + $0x48] sm:$0xff]
        %v259 = vld [vmem:[#allocation3 + $0x50] sm:$0xff]
        %v260 = vld [vmem:[#allocation3 + $0x58] sm:$0xff]
        %v261 = vld [vmem:[#allocation3 + $0x60] sm:$0xff]
        %v262 = vld [vmem:[#allocation3 + $0x68] sm:$0xff]
        %v263 = vld [vmem:[#allocation3 + $0x70] sm:$0xff]
        %v264 = vld [vmem:[#allocation3 + $0x78] sm:$0xff]
        %v265 = vld [vmem:[#allocation3 + $0x80] sm:$0xff]
        %v266 = vld [vmem:[#allocation3 + $0x88] sm:$0xff]
        %v267 = vld [vmem:[#allocation3 + $0x90] sm:$0xff]
        %v268 = vld [vmem:[#allocation3 + $0x98] sm:$0xff]
        %v269 = vld [vmem:[#allocation3 + $0xa0] sm:$0xff]
        %v270 = vld [vmem:[#allocation3 + $0xa8] sm:$0xff]
        %v271 = vld [vmem:[#allocation3 + $0xb0] sm:$0xff]
        %v272 = vld [vmem:[#allocation3 + $0xb8] sm:$0xff]
        %v273 = vld [vmem:[#allocation3 + $0xc0] sm:$0xff]
        %v274 = vld [vmem:[#allocation3 + $0xc8] sm:$0xff]
        %v275 = vld [vmem:[#allocation3 + $0xd0] sm:$0xff]
        %v276 = vld [vmem:[#allocation3 + $0xd8] sm:$0xff]
        %v277 = vld [vmem:[#allocation3 + $0xe0] sm:$0xff]
        %v278 = vld [vmem:[#allocation3 + $0xe8] sm:$0xff]
        %v279 = vld [vmem:[#allocation3 + $0xf0] sm:$0xff]
        %v280 = vld [vmem:[#allocation3 + $0xf8] sm:$0xff]
        %v281 = vld [vmem:[%s4] sm:$0x1]
        %v282 = vld [vmem:[%s238] sm:$0xff]
        %v283 = vld [vmem:[%s238 + $0x8] sm:$0xff]
        %v284 = vld [vmem:[%s238 + $0x10] sm:$0xff]
        %v285 = vld [vmem:[%s238 + $0x18] sm:$0xff]
        %v286 = vld [vmem:[%s238 + $0x20] sm:$0xff]
        %v287 = vld [vmem:[%s238 + $0x28] sm:$0xff]
        %v288 = vld [vmem:[%s238 + $0x30] sm:$0xff]
        %v289 = vld [vmem:[%s238 + $0x38] sm:$0xff]
        %v290 = vld [vmem:[%s2] sm:$0xff]
        %v291 = vld [vmem:[%s2 + $0x8] sm:$0xff]
        %vm292 = vcmask 64512
        %v294 = vsel %vm292, %v282, 0
        %v297 = vsel %vm292, %v283, 0
        %v300 = vsel %vm292, %v284, 0
        %v303 = vsel %vm292, %v285, 0
        %v306 = vsel %vm292, %v286, 0
        %v309 = vsel %vm292, %v287, 0
        %v312 = vsel %vm292, %v288, 0
        %v315 = vsel %vm292, %v289, 0
        %317 = vmatprep.subr.mxu0 0.0
        %318 = vmatpush1.msra.mxu0 0.0
        %319 = vmatprep.subr.mxu0 0.0
        %320 = vmatpush1.msra.mxu0 0.0
        %321 = vmatprep.subr.mxu0 0.0
        %322 = vmatpush1.msra.mxu0 0.0
        %323 = vmatprep.subr.mxu0 0.0
        %324 = vmatpush1.msra.mxu0 0.0
        %325 = vmatprep.subr.mxu0 0.0
        %326 = vmatpush1.msra.mxu0 0.0
        %327 = vmatprep.subr.mxu0 0.0
        %328 = vmatpush1.msra.mxu0 0.0
        %329 = vmatprep.subr.mxu0 0.0
        %330 = vmatpush1.msra.mxu0 0.0
        %331 = vmatprep.subr.mxu0 0.0
        %332 = vmatpush1.msra.mxu0 0.0
        %333 = vmatprep.subr.mxu0 0.0
        %334 = vmatpush1.msra.mxu0 0.0
        %335 = vmatprep.subr.mxu0 0.0
        %336 = vmatpush1.msra.mxu0 0.0
        %337 = vmatprep.subr.mxu0 0.0
        %338 = vmatpush1.msra.mxu0 0.0
        %339 = vmatprep.subr.mxu0 0.0
        %340 = vmatpush1.msra.mxu0 0.0
        %341 = vmatprep.subr.mxu0 0.0
        %342 = vmatpush1.msra.mxu0 0.0
        %343 = vmatprep.subr.mxu0 0.0
        %344 = vmatpush1.msra.mxu0 0.0
        %345 = vmatprep.subr.mxu0 0.0
        %346 = vmatpush1.msra.mxu0 0.0
        %347 = vmatprep.subr.mxu0 %v291
        %348 = vmatpush1.msra.mxu0 %v290
        %349 = vmatprep.subr.mxu0 0.0
        %350 = vmatpush2.msra.mxu0 0.0
        %351 = vmatprep.subr.mxu0 0.0
        %352 = vmatpush2.msra.mxu0 0.0
        %353 = vmatprep.subr.mxu0 0.0
        %354 = vmatpush2.msra.mxu0 0.0
        %355 = vmatprep.subr.mxu0 0.0
        %356 = vmatpush2.msra.mxu0 0.0
        %357 = vmatprep.subr.mxu0 0.0
        %358 = vmatpush2.msra.mxu0 0.0
        %359 = vmatprep.subr.mxu0 0.0
        %360 = vmatpush2.msra.mxu0 0.0
        %361 = vmatprep.subr.mxu0 0.0
        %362 = vmatpush2.msra.mxu0 0.0
        %363 = vmatprep.subr.mxu0 0.0
        %364 = vmatpush2.msra.mxu0 0.0
        %365 = vmatprep.subr.mxu0 0.0
        %366 = vmatpush2.msra.mxu0 0.0
        %367 = vmatprep.subr.mxu0 0.0
        %368 = vmatpush2.msra.mxu0 0.0
        %369 = vmatprep.subr.mxu0 0.0
        %370 = vmatpush2.msra.mxu0 0.0
        %371 = vmatprep.subr.mxu0 0.0
        %372 = vmatpush2.msra.mxu0 0.0
        %373 = vmatprep.subr.mxu0 0.0
        %374 = vmatpush2.msra.mxu0 0.0
        %375 = vmatprep.subr.mxu0 0.0
        %376 = vmatpush2.msra.mxu0 0.0
        %377 = vmatprep.subr.mxu0 0.0
        %378 = vmatpush2.msra.mxu0 0.0
        %379 = vmatprep.subr.mxu0 0.0
        %380 = vmatpush2.msra.mxu0 0.0
        %381 = vmatprep.mubr.f32.mxu0 0.0
        %382 = vmatmul.mubr.f32.gmra.mxu0 %v294
        %v383 = vpop.f32.mrf.mxu0
        %v384 = vadd.f32 0.0, %v383
        %v385 = vpop.f32.mrf.mxu0
        %v386 = vadd.f32 0.0, %v385
        %387 = vmatprep.mubr.f32.mxu0 0.0
        %388 = vmatmul.mubr.f32.gmra.mxu0 %v297
        %v389 = vpop.f32.mrf.mxu0
        %v390 = vadd.f32 0.0, %v389
        %v391 = vpop.f32.mrf.mxu0
        %v392 = vadd.f32 0.0, %v391
        %393 = vmatprep.mubr.f32.mxu0 0.0
        %394 = vmatmul.mubr.f32.gmra.mxu0 %v300
        %v395 = vpop.f32.mrf.mxu0
        %v396 = vadd.f32 0.0, %v395
        %v397 = vpop.f32.mrf.mxu0
        %v398 = vadd.f32 0.0, %v397
        %399 = vmatprep.mubr.f32.mxu0 0.0
        %400 = vmatmul.mubr.f32.gmra.mxu0 %v303
        %v401 = vpop.f32.mrf.mxu0
        %v402 = vadd.f32 0.0, %v401
        %v403 = vpop.f32.mrf.mxu0
        %v404 = vadd.f32 0.0, %v403
        %405 = vmatprep.mubr.f32.mxu0 0.0
        %406 = vmatmul.mubr.f32.gmra.mxu0 %v306
        %v407 = vpop.f32.mrf.mxu0
        %v408 = vadd.f32 0.0, %v407
        %v409 = vpop.f32.mrf.mxu0
        %v410 = vadd.f32 0.0, %v409
        %411 = vmatprep.mubr.f32.mxu0 0.0
        %412 = vmatmul.mubr.f32.gmra.mxu0 %v309
        %v413 = vpop.f32.mrf.mxu0
        %v414 = vadd.f32 0.0, %v413
        %v415 = vpop.f32.mrf.mxu0
        %v416 = vadd.f32 0.0, %v415
        %417 = vmatprep.mubr.f32.mxu0 0.0
        %418 = vmatmul.mubr.f32.gmra.mxu0 %v312
        %v419 = vpop.f32.mrf.mxu0
        %v420 = vadd.f32 0.0, %v419
        %v421 = vpop.f32.mrf.mxu0
        %v422 = vadd.f32 0.0, %v421
        %423 = vmatprep.mubr.f32.mxu0 0.0
        %424 = vmatmul.mubr.f32.gmra.mxu0 %v315
        %v425 = vpop.f32.mrf.mxu0
        %v426 = vadd.f32 0.0, %v425
        %v427 = vpop.f32.mrf.mxu0
        %v428 = vadd.f32 0.0, %v427
        %429 = vdwg.mxu0
        %v430 = vld [vmem:[#allocation2] sm:$0xff]
        %v431 = vld [vmem:[#allocation2 + $0x8] sm:$0xff]
        %432 = vmatprep.subr.mxu0 %v280
        %433 = vmatpush1.msra.mxu0 %v279
        %434 = vmatprep.subr.mxu0 %v278
        %435 = vmatpush1.msra.mxu0 %v277
        %436 = vmatprep.subr.mxu0 %v276
        %437 = vmatpush1.msra.mxu0 %v275
        %438 = vmatprep.subr.mxu0 %v274
        %439 = vmatpush1.msra.mxu0 %v273
        %440 = vmatprep.subr.mxu0 %v272
        %441 = vmatpush1.msra.mxu0 %v271
        %442 = vmatprep.subr.mxu0 %v270
        %443 = vmatpush1.msra.mxu0 %v269
        %444 = vmatprep.subr.mxu0 %v268
        %445 = vmatpush1.msra.mxu0 %v267
        %446 = vmatprep.subr.mxu0 %v266
        %447 = vmatpush1.msra.mxu0 %v265
        %448 = vmatprep.subr.mxu0 %v264
        %449 = vmatpush1.msra.mxu0 %v263
        %450 = vmatprep.subr.mxu0 %v262
        %451 = vmatpush1.msra.mxu0 %v261
        %452 = vmatprep.subr.mxu0 %v260
        %453 = vmatpush1.msra.mxu0 %v259
        %454 = vmatprep.subr.mxu0 %v258
        %455 = vmatpush1.msra.mxu0 %v257
        %456 = vmatprep.subr.mxu0 %v256
        %457 = vmatpush1.msra.mxu0 %v255
        %458 = vmatprep.subr.mxu0 %v254
        %459 = vmatpush1.msra.mxu0 %v253
        %460 = vmatprep.subr.mxu0 %v252
        %461 = vmatpush1.msra.mxu0 %v251
        %462 = vmatprep.subr.mxu0 %v250
        %463 = vmatpush1.msra.mxu0 %v249
        %464 = vmatprep.subr.mxu0 0.0
        %465 = vmatpush2.msra.mxu0 0.0
        %466 = vmatprep.subr.mxu0 0.0
        %467 = vmatpush2.msra.mxu0 0.0
        %468 = vmatprep.subr.mxu0 0.0
        %469 = vmatpush2.msra.mxu0 0.0
        %470 = vmatprep.subr.mxu0 0.0
        %471 = vmatpush2.msra.mxu0 0.0
        %472 = vmatprep.subr.mxu0 0.0
        %473 = vmatpush2.msra.mxu0 0.0
        %474 = vmatprep.subr.mxu0 0.0
        %475 = vmatpush2.msra.mxu0 0.0
        %476 = vmatprep.subr.mxu0 0.0
        %477 = vmatpush2.msra.mxu0 0.0
        %478 = vmatprep.subr.mxu0 0.0
        %479 = vmatpush2.msra.mxu0 0.0
        %480 = vmatprep.subr.mxu0 0.0
        %481 = vmatpush2.msra.mxu0 0.0
        %482 = vmatprep.subr.mxu0 0.0
        %483 = vmatpush2.msra.mxu0 0.0
        %484 = vmatprep.subr.mxu0 0.0
        %485 = vmatpush2.msra.mxu0 0.0
        %486 = vmatprep.subr.mxu0 0.0
        %487 = vmatpush2.msra.mxu0 0.0
        %488 = vmatprep.subr.mxu0 0.0
        %489 = vmatpush2.msra.mxu0 0.0
        %490 = vmatprep.subr.mxu0 0.0
        %491 = vmatpush2.msra.mxu0 0.0
        %492 = vmatprep.subr.mxu0 0.0
        %493 = vmatpush2.msra.mxu0 0.0
        %494 = vmatprep.subr.mxu0 0.0
        %495 = vmatpush2.msra.mxu0 0.0
        %496 = vmatprep.mubr.f32.mxu0 0.0
        %497 = vmatmul.mubr.f32.gmra.mxu0 %v430
        %v498 = vpop.f32.mrf.mxu0
        %v499 = vadd.f32 0.0, %v498
        %v500 = vpop.f32.mrf.mxu0
        %v501 = vadd.f32 0.0, %v500
        %502 = vmatprep.mubr.f32.mxu0 0.0
        %503 = vmatmul.mubr.f32.gmra.mxu0 %v431
        %v504 = vpop.f32.mrf.mxu0
        %v505 = vadd.f32 0.0, %v504
        %v506 = vpop.f32.mrf.mxu0
        %v507 = vadd.f32 0.0, %v506
        %508 = vdwg.mxu0
        %v509 = vadd.f32 %v384, %v499
        %v510 = vadd.f32 %v390, %v505
        %vm511 = vcmask 130048
        %v513 = vsel %vm511, %v247, 0
        %v516 = vsel %vm511, %v248, 0
        %518 = vmatprep.subr.mxu0 0.0
        %519 = vmatpush1.msra.mxu0 0.0
        %520 = vmatprep.subr.mxu0 0.0
        %521 = vmatpush1.msra.mxu0 0.0
        %522 = vmatprep.subr.mxu0 0.0
        %523 = vmatpush1.msra.mxu0 0.0
        %524 = vmatprep.subr.mxu0 0.0
        %525 = vmatpush1.msra.mxu0 0.0
        %526 = vmatprep.subr.mxu0 0.0
        %527 = vmatpush1.msra.mxu0 0.0
        %528 = vmatprep.subr.mxu0 0.0
        %529 = vmatpush1.msra.mxu0 0.0
        %530 = vmatprep.subr.mxu0 0.0
        %531 = vmatpush1.msra.mxu0 0.0
        %532 = vmatprep.subr.mxu0 0.0
        %533 = vmatpush1.msra.mxu0 0.0
        %534 = vmatprep.subr.mxu0 0.0
        %535 = vmatpush1.msra.mxu0 0.0
        %536 = vmatprep.subr.mxu0 0.0
        %537 = vmatpush1.msra.mxu0 0.0
        %538 = vmatprep.subr.mxu0 0.0
        %539 = vmatpush1.msra.mxu0 0.0
        %540 = vmatprep.subr.mxu0 0.0
        %541 = vmatpush1.msra.mxu0 0.0
        %542 = vmatprep.subr.mxu0 0.0
        %543 = vmatpush1.msra.mxu0 0.0
        %544 = vmatprep.subr.mxu0 0.0
        %545 = vmatpush1.msra.mxu0 0.0
        %546 = vmatprep.subr.mxu0 0.0
        %547 = vmatpush1.msra.mxu0 %v510
        %548 = vmatprep.subr.mxu0 0.0
        %549 = vmatpush1.msra.mxu0 %v509
        %550 = vmatprep.subr.mxu0 0.0
        %551 = vmatpush2.msra.mxu0 0.0
        %552 = vmatprep.subr.mxu0 0.0
        %553 = vmatpush2.msra.mxu0 0.0
        %554 = vmatprep.subr.mxu0 0.0
        %555 = vmatpush2.msra.mxu0 0.0
        %556 = vmatprep.subr.mxu0 0.0
        %557 = vmatpush2.msra.mxu0 0.0
        %558 = vmatprep.subr.mxu0 0.0
        %559 = vmatpush2.msra.mxu0 0.0
        %560 = vmatprep.subr.mxu0 0.0
        %561 = vmatpush2.msra.mxu0 0.0
        %562 = vmatprep.subr.mxu0 0.0
        %563 = vmatpush2.msra.mxu0 0.0
        %564 = vmatprep.subr.mxu0 0.0
        %565 = vmatpush2.msra.mxu0 0.0
        %566 = vmatprep.subr.mxu0 0.0
        %567 = vmatpush2.msra.mxu0 0.0
        %568 = vmatprep.subr.mxu0 0.0
        %569 = vmatpush2.msra.mxu0 0.0
        %570 = vmatprep.subr.mxu0 0.0
        %571 = vmatpush2.msra.mxu0 0.0
        %572 = vmatprep.subr.mxu0 0.0
        %573 = vmatpush2.msra.mxu0 0.0
        %574 = vmatprep.subr.mxu0 0.0
        %575 = vmatpush2.msra.mxu0 0.0
        %576 = vmatprep.subr.mxu0 0.0
        %577 = vmatpush2.msra.mxu0 0.0
        %578 = vmatprep.subr.mxu0 0.0
        %579 = vmatpush2.msra.mxu0 0.0
        %580 = vmatprep.subr.mxu0 0.0
        %581 = vmatpush2.msra.mxu0 0.0
        %582 = vmatprep.mubr.f32.mxu0 0.0
        %583 = vmatmul.mubr.f32.gmra.mxu0 %v513
        %v584 = vpop.f32.mrf.mxu0
        %v585 = vadd.f32 %v386, %v584
        %v586 = vpop.f32.mrf.mxu0
        %587 = vmatprep.mubr.f32.mxu0 0.0
        %588 = vmatmul.mubr.f32.gmra.mxu0 %v516
        %v589 = vpop.f32.mrf.mxu0
        %v590 = vadd.f32 %v392, %v589
        %v591 = vpop.f32.mrf.mxu0
        %592 = vdwg.mxu0
        %v593 = vadd.f32 %v585, %v501
        %v594 = vadd.f32 %v590, %v507
        %v596 = vlaneseq
        %v597 = vshrl.u32 %v596, 7
        %v598 = vsub.s32 0, %v597
        %v599 = vrot.slane %v281, %v598
        %v601 = vadd.f32 %v593, %v599
        %v602 = vadd.f32 %v594, %v599
        %v603 = vxor.u32 %v601, 2147483648
        %v604 = vxor.u32 %v602, 2147483648
        %v605 = vmul.f32 %v603, 1.442695
        %v606 = vpow.pop %v605
        %v607 = vmul.f32 %v604, 1.442695
        %v608 = vpow.pop %v607
        %v609 = vadd.f32 %v606, 1.0
        %v610 = vadd.f32 %v608, 1.0
        %v611 = vrcp.pop %v609
        %v612 = vmul.f32 1.0, %v611
        %v613 = vrcp.pop %v610
        %v614 = vmul.f32 1.0, %v613
        %615 = vst [vmem:[%s233] sm:$0xff] %v612
        %616 = vst [vmem:[%s233 + $0x8] sm:$0xff] %v614
        %617 = vmatprep.subr.mxu0 %v280
        %618 = vmatpush1.msra.mxu0 %v279
        %619 = vmatprep.subr.mxu0 %v278
        %620 = vmatpush1.msra.mxu0 %v277
        %621 = vmatprep.subr.mxu0 %v276
        %622 = vmatpush1.msra.mxu0 %v275
        %623 = vmatprep.subr.mxu0 %v274
        %624 = vmatpush1.msra.mxu0 %v273
        %625 = vmatprep.subr.mxu0 %v272
        %626 = vmatpush1.msra.mxu0 %v271
        %627 = vmatprep.subr.mxu0 %v270
        %628 = vmatpush1.msra.mxu0 %v269
        %629 = vmatprep.subr.mxu0 %v268
        %630 = vmatpush1.msra.mxu0 %v267
        %631 = vmatprep.subr.mxu0 %v266
        %632 = vmatpush1.msra.mxu0 %v265
        %633 = vmatprep.subr.mxu0 %v264
        %634 = vmatpush1.msra.mxu0 %v263
        %635 = vmatprep.subr.mxu0 %v262
        %636 = vmatpush1.msra.mxu0 %v261
        %637 = vmatprep.subr.mxu0 %v260
        %638 = vmatpush1.msra.mxu0 %v259
        %639 = vmatprep.subr.mxu0 %v258
        %640 = vmatpush1.msra.mxu0 %v257
        %641 = vmatprep.subr.mxu0 %v256
        %642 = vmatpush1.msra.mxu0 %v255
        %643 = vmatprep.subr.mxu0 %v254
        %644 = vmatpush1.msra.mxu0 %v253
        %645 = vmatprep.subr.mxu0 %v252
        %646 = vmatpush1.msra.mxu0 %v251
        %647 = vmatprep.subr.mxu0 %v250
        %648 = vmatpush1.msra.mxu0 %v249
        %649 = vmatprep.subr.mxu0 0.0
        %650 = vmatpush2.msra.mxu0 0.0
        %651 = vmatprep.subr.mxu0 0.0
        %652 = vmatpush2.msra.mxu0 0.0
        %653 = vmatprep.subr.mxu0 0.0
        %654 = vmatpush2.msra.mxu0 0.0
        %655 = vmatprep.subr.mxu0 0.0
        %656 = vmatpush2.msra.mxu0 0.0
        %657 = vmatprep.subr.mxu0 0.0
        %658 = vmatpush2.msra.mxu0 0.0
        %659 = vmatprep.subr.mxu0 0.0
        %660 = vmatpush2.msra.mxu0 0.0
        %661 = vmatprep.subr.mxu0 0.0
        %662 = vmatpush2.msra.mxu0 0.0
        %663 = vmatprep.subr.mxu0 0.0
        %664 = vmatpush2.msra.mxu0 0.0
        %665 = vmatprep.subr.mxu0 0.0
        %666 = vmatpush2.msra.mxu0 0.0
        %667 = vmatprep.subr.mxu0 0.0
        %668 = vmatpush2.msra.mxu0 0.0
        %669 = vmatprep.subr.mxu0 0.0
        %670 = vmatpush2.msra.mxu0 0.0
        %671 = vmatprep.subr.mxu0 0.0
        %672 = vmatpush2.msra.mxu0 0.0
        %673 = vmatprep.subr.mxu0 0.0
        %674 = vmatpush2.msra.mxu0 0.0
        %675 = vmatprep.subr.mxu0 0.0
        %676 = vmatpush2.msra.mxu0 0.0
        %677 = vmatprep.subr.mxu0 0.0
        %678 = vmatpush2.msra.mxu0 0.0
        %679 = vmatprep.subr.mxu0 0.0
        %680 = vmatpush2.msra.mxu0 0.0
        %681 = vmatprep.mubr.f32.mxu0 0.0
        %682 = vmatmul.mubr.f32.gmra.mxu0 %v612
        %v683 = vpop.f32.mrf.mxu0
        %v684 = vadd.f32 0.0, %v683
        %v685 = vpop.f32.mrf.mxu0
        %v686 = vadd.f32 0.0, %v685
        %687 = vmatprep.mubr.f32.mxu0 0.0
        %688 = vmatmul.mubr.f32.gmra.mxu0 %v614
        %v689 = vpop.f32.mrf.mxu0
        %v690 = vadd.f32 0.0, %v689
        %v691 = vpop.f32.mrf.mxu0
        %v692 = vadd.f32 0.0, %v691
        %693 = vdwg.mxu0
        %v694 = vadd.f32 %v396, %v684
        %v695 = vadd.f32 %v402, %v690
        %696 = vmatprep.subr.mxu0 0.0
        %697 = vmatpush1.msra.mxu0 0.0
        %698 = vmatprep.subr.mxu0 0.0
        %699 = vmatpush1.msra.mxu0 0.0
        %700 = vmatprep.subr.mxu0 0.0
        %701 = vmatpush1.msra.mxu0 0.0
        %702 = vmatprep.subr.mxu0 0.0
        %703 = vmatpush1.msra.mxu0 0.0
        %704 = vmatprep.subr.mxu0 0.0
        %705 = vmatpush1.msra.mxu0 0.0
        %706 = vmatprep.subr.mxu0 0.0
        %707 = vmatpush1.msra.mxu0 0.0
        %708 = vmatprep.subr.mxu0 0.0
        %709 = vmatpush1.msra.mxu0 0.0
        %710 = vmatprep.subr.mxu0 0.0
        %711 = vmatpush1.msra.mxu0 0.0
        %712 = vmatprep.subr.mxu0 0.0
        %713 = vmatpush1.msra.mxu0 0.0
        %714 = vmatprep.subr.mxu0 0.0
        %715 = vmatpush1.msra.mxu0 0.0
        %716 = vmatprep.subr.mxu0 0.0
        %717 = vmatpush1.msra.mxu0 0.0
        %718 = vmatprep.subr.mxu0 0.0
        %719 = vmatpush1.msra.mxu0 0.0
        %720 = vmatprep.subr.mxu0 0.0
        %721 = vmatpush1.msra.mxu0 0.0
        %722 = vmatprep.subr.mxu0 0.0
        %723 = vmatpush1.msra.mxu0 0.0
        %724 = vmatprep.subr.mxu0 0.0
        %725 = vmatpush1.msra.mxu0 %v695
        %726 = vmatprep.subr.mxu0 0.0
        %727 = vmatpush1.msra.mxu0 %v694
        %728 = vmatprep.subr.mxu0 0.0
        %729 = vmatpush2.msra.mxu0 0.0
        %730 = vmatprep.subr.mxu0 0.0
        %731 = vmatpush2.msra.mxu0 0.0
        %732 = vmatprep.subr.mxu0 0.0
        %733 = vmatpush2.msra.mxu0 0.0
        %734 = vmatprep.subr.mxu0 0.0
        %735 = vmatpush2.msra.mxu0 0.0
        %736 = vmatprep.subr.mxu0 0.0
        %737 = vmatpush2.msra.mxu0 0.0
        %738 = vmatprep.subr.mxu0 0.0
        %739 = vmatpush2.msra.mxu0 0.0
        %740 = vmatprep.subr.mxu0 0.0
        %741 = vmatpush2.msra.mxu0 0.0
        %742 = vmatprep.subr.mxu0 0.0
        %743 = vmatpush2.msra.mxu0 0.0
        %744 = vmatprep.subr.mxu0 0.0
        %745 = vmatpush2.msra.mxu0 0.0
        %746 = vmatprep.subr.mxu0 0.0
        %747 = vmatpush2.msra.mxu0 0.0
        %748 = vmatprep.subr.mxu0 0.0
        %749 = vmatpush2.msra.mxu0 0.0
        %750 = vmatprep.subr.mxu0 0.0
        %751 = vmatpush2.msra.mxu0 0.0
        %752 = vmatprep.subr.mxu0 0.0
        %753 = vmatpush2.msra.mxu0 0.0
        %754 = vmatprep.subr.mxu0 0.0
        %755 = vmatpush2.msra.mxu0 0.0
        %756 = vmatprep.subr.mxu0 0.0
        %757 = vmatpush2.msra.mxu0 0.0
        %758 = vmatprep.subr.mxu0 0.0
        %759 = vmatpush2.msra.mxu0 0.0
        %760 = vmatprep.mubr.f32.mxu0 0.0
        %761 = vmatmul.mubr.f32.gmra.mxu0 %v513
        %v762 = vpop.f32.mrf.mxu0
        %v763 = vadd.f32 %v398, %v762
        %v764 = vpop.f32.mrf.mxu0
        %765 = vmatprep.mubr.f32.mxu0 0.0
        %766 = vmatmul.mubr.f32.gmra.mxu0 %v516
        %v767 = vpop.f32.mrf.mxu0
        %v768 = vadd.f32 %v404, %v767
        %v769 = vpop.f32.mrf.mxu0
        %770 = vdwg.mxu0
        %v771 = vadd.f32 %v763, %v686
        %v772 = vadd.f32 %v768, %v692
        %v773 = vadd.f32 %v771, %v599
        %v774 = vadd.f32 %v772, %v599
        %v775 = vxor.u32 %v773, 2147483648
        %v776 = vxor.u32 %v774, 2147483648
        %v777 = vmul.f32 %v775, 1.442695
        %v778 = vpow.pop %v777
        %v779 = vmul.f32 %v776, 1.442695
        %v780 = vpow.pop %v779
        %v781 = vadd.f32 %v778, 1.0
        %v782 = vadd.f32 %v780, 1.0
        %v783 = vrcp.pop %v781
        %v784 = vmul.f32 1.0, %v783
        %v785 = vrcp.pop %v782
        %v786 = vmul.f32 1.0, %v785
        %787 = vst [vmem:[%s233 + $0x10] sm:$0xff] %v784
        %788 = vst [vmem:[%s233 + $0x18] sm:$0xff] %v786
        %789 = vmatprep.subr.mxu0 %v280
        %790 = vmatpush1.msra.mxu0 %v279
        %791 = vmatprep.subr.mxu0 %v278
        %792 = vmatpush1.msra.mxu0 %v277
        %793 = vmatprep.subr.mxu0 %v276
        %794 = vmatpush1.msra.mxu0 %v275
        %795 = vmatprep.subr.mxu0 %v274
        %796 = vmatpush1.msra.mxu0 %v273
        %797 = vmatprep.subr.mxu0 %v272
        %798 = vmatpush1.msra.mxu0 %v271
        %799 = vmatprep.subr.mxu0 %v270
        %800 = vmatpush1.msra.mxu0 %v269
        %801 = vmatprep.subr.mxu0 %v268
        %802 = vmatpush1.msra.mxu0 %v267
        %803 = vmatprep.subr.mxu0 %v266
        %804 = vmatpush1.msra.mxu0 %v265
        %805 = vmatprep.subr.mxu0 %v264
        %806 = vmatpush1.msra.mxu0 %v263
        %807 = vmatprep.subr.mxu0 %v262
        %808 = vmatpush1.msra.mxu0 %v261
        %809 = vmatprep.subr.mxu0 %v260
        %810 = vmatpush1.msra.mxu0 %v259
        %811 = vmatprep.subr.mxu0 %v258
        %812 = vmatpush1.msra.mxu0 %v257
        %813 = vmatprep.subr.mxu0 %v256
        %814 = vmatpush1.msra.mxu0 %v255
        %815 = vmatprep.subr.mxu0 %v254
        %816 = vmatpush1.msra.mxu0 %v253
        %817 = vmatprep.subr.mxu0 %v252
        %818 = vmatpush1.msra.mxu0 %v251
        %819 = vmatprep.subr.mxu0 %v250
        %820 = vmatpush1.msra.mxu0 %v249
        %821 = vmatprep.subr.mxu0 0.0
        %822 = vmatpush2.msra.mxu0 0.0
        %823 = vmatprep.subr.mxu0 0.0
        %824 = vmatpush2.msra.mxu0 0.0
        %825 = vmatprep.subr.mxu0 0.0
        %826 = vmatpush2.msra.mxu0 0.0
        %827 = vmatprep.subr.mxu0 0.0
        %828 = vmatpush2.msra.mxu0 0.0
        %829 = vmatprep.subr.mxu0 0.0
        %830 = vmatpush2.msra.mxu0 0.0
        %831 = vmatprep.subr.mxu0 0.0
        %832 = vmatpush2.msra.mxu0 0.0
        %833 = vmatprep.subr.mxu0 0.0
        %834 = vmatpush2.msra.mxu0 0.0
        %835 = vmatprep.subr.mxu0 0.0
        %836 = vmatpush2.msra.mxu0 0.0
        %837 = vmatprep.subr.mxu0 0.0
        %838 = vmatpush2.msra.mxu0 0.0
        %839 = vmatprep.subr.mxu0 0.0
        %840 = vmatpush2.msra.mxu0 0.0
        %841 = vmatprep.subr.mxu0 0.0
        %842 = vmatpush2.msra.mxu0 0.0
        %843 = vmatprep.subr.mxu0 0.0
        %844 = vmatpush2.msra.mxu0 0.0
        %845 = vmatprep.subr.mxu0 0.0
        %846 = vmatpush2.msra.mxu0 0.0
        %847 = vmatprep.subr.mxu0 0.0
        %848 = vmatpush2.msra.mxu0 0.0
        %849 = vmatprep.subr.mxu0 0.0
        %850 = vmatpush2.msra.mxu0 0.0
        %851 = vmatprep.subr.mxu0 0.0
        %852 = vmatpush2.msra.mxu0 0.0
        %853 = vmatprep.mubr.f32.mxu0 0.0
        %854 = vmatmul.mubr.f32.gmra.mxu0 %v784
        %v855 = vpop.f32.mrf.mxu0
        %v856 = vadd.f32 0.0, %v855
        %v857 = vpop.f32.mrf.mxu0
        %v858 = vadd.f32 0.0, %v857
        %859 = vmatprep.mubr.f32.mxu0 0.0
        %860 = vmatmul.mubr.f32.gmra.mxu0 %v786
        %v861 = vpop.f32.mrf.mxu0
        %v862 = vadd.f32 0.0, %v861
        %v863 = vpop.f32.mrf.mxu0
        %v864 = vadd.f32 0.0, %v863
        %865 = vdwg.mxu0
        %v866 = vadd.f32 %v408, %v856
        %v867 = vadd.f32 %v414, %v862
        %868 = vmatprep.subr.mxu0 0.0
        %869 = vmatpush1.msra.mxu0 0.0
        %870 = vmatprep.subr.mxu0 0.0
        %871 = vmatpush1.msra.mxu0 0.0
        %872 = vmatprep.subr.mxu0 0.0
        %873 = vmatpush1.msra.mxu0 0.0
        %874 = vmatprep.subr.mxu0 0.0
        %875 = vmatpush1.msra.mxu0 0.0
        %876 = vmatprep.subr.mxu0 0.0
        %877 = vmatpush1.msra.mxu0 0.0
        %878 = vmatprep.subr.mxu0 0.0
        %879 = vmatpush1.msra.mxu0 0.0
        %880 = vmatprep.subr.mxu0 0.0
        %881 = vmatpush1.msra.mxu0 0.0
        %882 = vmatprep.subr.mxu0 0.0
        %883 = vmatpush1.msra.mxu0 0.0
        %884 = vmatprep.subr.mxu0 0.0
        %885 = vmatpush1.msra.mxu0 0.0
        %886 = vmatprep.subr.mxu0 0.0
        %887 = vmatpush1.msra.mxu0 0.0
        %888 = vmatprep.subr.mxu0 0.0
        %889 = vmatpush1.msra.mxu0 0.0
        %890 = vmatprep.subr.mxu0 0.0
        %891 = vmatpush1.msra.mxu0 0.0
        %892 = vmatprep.subr.mxu0 0.0
        %893 = vmatpush1.msra.mxu0 0.0
        %894 = vmatprep.subr.mxu0 0.0
        %895 = vmatpush1.msra.mxu0 0.0
        %896 = vmatprep.subr.mxu0 0.0
        %897 = vmatpush1.msra.mxu0 %v867
        %898 = vmatprep.subr.mxu0 0.0
        %899 = vmatpush1.msra.mxu0 %v866
        %900 = vmatprep.subr.mxu0 0.0
        %901 = vmatpush2.msra.mxu0 0.0
        %902 = vmatprep.subr.mxu0 0.0
        %903 = vmatpush2.msra.mxu0 0.0
        %904 = vmatprep.subr.mxu0 0.0
        %905 = vmatpush2.msra.mxu0 0.0
        %906 = vmatprep.subr.mxu0 0.0
        %907 = vmatpush2.msra.mxu0 0.0
        %908 = vmatprep.subr.mxu0 0.0
        %909 = vmatpush2.msra.mxu0 0.0
        %910 = vmatprep.subr.mxu0 0.0
        %911 = vmatpush2.msra.mxu0 0.0
        %912 = vmatprep.subr.mxu0 0.0
        %913 = vmatpush2.msra.mxu0 0.0
        %914 = vmatprep.subr.mxu0 0.0
        %915 = vmatpush2.msra.mxu0 0.0
        %916 = vmatprep.subr.mxu0 0.0
        %917 = vmatpush2.msra.mxu0 0.0
        %918 = vmatprep.subr.mxu0 0.0
        %919 = vmatpush2.msra.mxu0 0.0
        %920 = vmatprep.subr.mxu0 0.0
        %921 = vmatpush2.msra.mxu0 0.0
        %922 = vmatprep.subr.mxu0 0.0
        %923 = vmatpush2.msra.mxu0 0.0
        %924 = vmatprep.subr.mxu0 0.0
        %925 = vmatpush2.msra.mxu0 0.0
        %926 = vmatprep.subr.mxu0 0.0
        %927 = vmatpush2.msra.mxu0 0.0
        %928 = vmatprep.subr.mxu0 0.0
        %929 = vmatpush2.msra.mxu0 0.0
        %930 = vmatprep.subr.mxu0 0.0
        %931 = vmatpush2.msra.mxu0 0.0
        %932 = vmatprep.mubr.f32.mxu0 0.0
        %933 = vmatmul.mubr.f32.gmra.mxu0 %v513
        %v934 = vpop.f32.mrf.mxu0
        %v935 = vadd.f32 %v410, %v934
        %v936 = vpop.f32.mrf.mxu0
        %937 = vmatprep.mubr.f32.mxu0 0.0
        %938 = vmatmul.mubr.f32.gmra.mxu0 %v516
        %v939 = vpop.f32.mrf.mxu0
        %v940 = vadd.f32 %v416, %v939
        %v941 = vpop.f32.mrf.mxu0
        %942 = vdwg.mxu0
        %v943 = vadd.f32 %v935, %v858
        %v944 = vadd.f32 %v940, %v864
        %v945 = vadd.f32 %v943, %v599
        %v946 = vadd.f32 %v944, %v599
        %v947 = vxor.u32 %v945, 2147483648
        %v948 = vxor.u32 %v946, 2147483648
        %v949 = vmul.f32 %v947, 1.442695
        %v950 = vpow.pop %v949
        %v951 = vmul.f32 %v948, 1.442695
        %v952 = vpow.pop %v951
        %v953 = vadd.f32 %v950, 1.0
        %v954 = vadd.f32 %v952, 1.0
        %v955 = vrcp.pop %v953
        %v956 = vmul.f32 1.0, %v955
        %v957 = vrcp.pop %v954
        %v958 = vmul.f32 1.0, %v957
        %959 = vst [vmem:[%s233 + $0x20] sm:$0xff] %v956
        %960 = vst [vmem:[%s233 + $0x28] sm:$0xff] %v958
        %961 = vmatprep.subr.mxu0 %v280
        %962 = vmatpush1.msra.mxu0 %v279
        %963 = vmatprep.subr.mxu0 %v278
        %964 = vmatpush1.msra.mxu0 %v277
        %965 = vmatprep.subr.mxu0 %v276
        %966 = vmatpush1.msra.mxu0 %v275
        %967 = vmatprep.subr.mxu0 %v274
        %968 = vmatpush1.msra.mxu0 %v273
        %969 = vmatprep.subr.mxu0 %v272
        %970 = vmatpush1.msra.mxu0 %v271
        %971 = vmatprep.subr.mxu0 %v270
        %972 = vmatpush1.msra.mxu0 %v269
        %973 = vmatprep.subr.mxu0 %v268
        %974 = vmatpush1.msra.mxu0 %v267
        %975 = vmatprep.subr.mxu0 %v266
        %976 = vmatpush1.msra.mxu0 %v265
        %977 = vmatprep.subr.mxu0 %v264
        %978 = vmatpush1.msra.mxu0 %v263
        %979 = vmatprep.subr.mxu0 %v262
        %980 = vmatpush1.msra.mxu0 %v261
        %981 = vmatprep.subr.mxu0 %v260
        %982 = vmatpush1.msra.mxu0 %v259
        %983 = vmatprep.subr.mxu0 %v258
        %984 = vmatpush1.msra.mxu0 %v257
        %985 = vmatprep.subr.mxu0 %v256
        %986 = vmatpush1.msra.mxu0 %v255
        %987 = vmatprep.subr.mxu0 %v254
        %988 = vmatpush1.msra.mxu0 %v253
        %989 = vmatprep.subr.mxu0 %v252
        %990 = vmatpush1.msra.mxu0 %v251
        %991 = vmatprep.subr.mxu0 %v250
        %992 = vmatpush1.msra.mxu0 %v249
        %993 = vmatprep.subr.mxu0 0.0
        %994 = vmatpush2.msra.mxu0 0.0
        %995 = vmatprep.subr.mxu0 0.0
        %996 = vmatpush2.msra.mxu0 0.0
        %997 = vmatprep.subr.mxu0 0.0
        %998 = vmatpush2.msra.mxu0 0.0
        %999 = vmatprep.subr.mxu0 0.0
        %1000 = vmatpush2.msra.mxu0 0.0
        %1001 = vmatprep.subr.mxu0 0.0
        %1002 = vmatpush2.msra.mxu0 0.0
        %1003 = vmatprep.subr.mxu0 0.0
        %1004 = vmatpush2.msra.mxu0 0.0
        %1005 = vmatprep.subr.mxu0 0.0
        %1006 = vmatpush2.msra.mxu0 0.0
        %1007 = vmatprep.subr.mxu0 0.0
        %1008 = vmatpush2.msra.mxu0 0.0
        %1009 = vmatprep.subr.mxu0 0.0
        %1010 = vmatpush2.msra.mxu0 0.0
        %1011 = vmatprep.subr.mxu0 0.0
        %1012 = vmatpush2.msra.mxu0 0.0
        %1013 = vmatprep.subr.mxu0 0.0
        %1014 = vmatpush2.msra.mxu0 0.0
        %1015 = vmatprep.subr.mxu0 0.0
        %1016 = vmatpush2.msra.mxu0 0.0
        %1017 = vmatprep.subr.mxu0 0.0
        %1018 = vmatpush2.msra.mxu0 0.0
        %1019 = vmatprep.subr.mxu0 0.0
        %1020 = vmatpush2.msra.mxu0 0.0
        %1021 = vmatprep.subr.mxu0 0.0
        %1022 = vmatpush2.msra.mxu0 0.0
        %1023 = vmatprep.subr.mxu0 0.0
        %1024 = vmatpush2.msra.mxu0 0.0
        %1025 = vmatprep.mubr.f32.mxu0 0.0
        %1026 = vmatmul.mubr.f32.gmra.mxu0 %v956
        %v1027 = vpop.f32.mrf.mxu0
        %v1028 = vadd.f32 0.0, %v1027
        %v1029 = vpop.f32.mrf.mxu0
        %v1030 = vadd.f32 0.0, %v1029
        %1031 = vmatprep.mubr.f32.mxu0 0.0
        %1032 = vmatmul.mubr.f32.gmra.mxu0 %v958
        %v1033 = vpop.f32.mrf.mxu0
        %v1034 = vadd.f32 0.0, %v1033
        %v1035 = vpop.f32.mrf.mxu0
        %v1036 = vadd.f32 0.0, %v1035
        %1037 = vdwg.mxu0
        %v1038 = vadd.f32 %v420, %v1028
        %v1039 = vadd.f32 %v426, %v1034
        %1040 = vmatprep.subr.mxu0 0.0
        %1041 = vmatpush1.msra.mxu0 0.0
        %1042 = vmatprep.subr.mxu0 0.0
        %1043 = vmatpush1.msra.mxu0 0.0
        %1044 = vmatprep.subr.mxu0 0.0
        %1045 = vmatpush1.msra.mxu0 0.0
        %1046 = vmatprep.subr.mxu0 0.0
        %1047 = vmatpush1.msra.mxu0 0.0
        %1048 = vmatprep.subr.mxu0 0.0
        %1049 = vmatpush1.msra.mxu0 0.0
        %1050 = vmatprep.subr.mxu0 0.0
        %1051 = vmatpush1.msra.mxu0 0.0
        %1052 = vmatprep.subr.mxu0 0.0
        %1053 = vmatpush1.msra.mxu0 0.0
        %1054 = vmatprep.subr.mxu0 0.0
        %1055 = vmatpush1.msra.mxu0 0.0
        %1056 = vmatprep.subr.mxu0 0.0
        %1057 = vmatpush1.msra.mxu0 0.0
        %1058 = vmatprep.subr.mxu0 0.0
        %1059 = vmatpush1.msra.mxu0 0.0
        %1060 = vmatprep.subr.mxu0 0.0
        %1061 = vmatpush1.msra.mxu0 0.0
        %1062 = vmatprep.subr.mxu0 0.0
        %1063 = vmatpush1.msra.mxu0 0.0
        %1064 = vmatprep.subr.mxu0 0.0
        %1065 = vmatpush1.msra.mxu0 0.0
        %1066 = vmatprep.subr.mxu0 0.0
        %1067 = vmatpush1.msra.mxu0 0.0
        %1068 = vmatprep.subr.mxu0 0.0
        %1069 = vmatpush1.msra.mxu0 %v1039
        %1070 = vmatprep.subr.mxu0 0.0
        %1071 = vmatpush1.msra.mxu0 %v1038
        %1072 = vmatprep.subr.mxu0 0.0
        %1073 = vmatpush2.msra.mxu0 0.0
        %1074 = vmatprep.subr.mxu0 0.0
        %1075 = vmatpush2.msra.mxu0 0.0
        %1076 = vmatprep.subr.mxu0 0.0
        %1077 = vmatpush2.msra.mxu0 0.0
        %1078 = vmatprep.subr.mxu0 0.0
        %1079 = vmatpush2.msra.mxu0 0.0
        %1080 = vmatprep.subr.mxu0 0.0
        %1081 = vmatpush2.msra.mxu0 0.0
        %1082 = vmatprep.subr.mxu0 0.0
        %1083 = vmatpush2.msra.mxu0 0.0
        %1084 = vmatprep.subr.mxu0 0.0
        %1085 = vmatpush2.msra.mxu0 0.0
        %1086 = vmatprep.subr.mxu0 0.0
        %1087 = vmatpush2.msra.mxu0 0.0
        %1088 = vmatprep.subr.mxu0 0.0
        %1089 = vmatpush2.msra.mxu0 0.0
        %1090 = vmatprep.subr.mxu0 0.0
        %1091 = vmatpush2.msra.mxu0 0.0
        %1092 = vmatprep.subr.mxu0 0.0
        %1093 = vmatpush2.msra.mxu0 0.0
        %1094 = vmatprep.subr.mxu0 0.0
        %1095 = vmatpush2.msra.mxu0 0.0
        %1096 = vmatprep.subr.mxu0 0.0
        %1097 = vmatpush2.msra.mxu0 0.0
        %1098 = vmatprep.subr.mxu0 0.0
        %1099 = vmatpush2.msra.mxu0 0.0
        %1100 = vmatprep.subr.mxu0 0.0
        %1101 = vmatpush2.msra.mxu0 0.0
        %1102 = vmatprep.subr.mxu0 0.0
        %1103 = vmatpush2.msra.mxu0 0.0
        %1104 = vmatprep.mubr.f32.mxu0 0.0
        %1105 = vmatmul.mubr.f32.gmra.mxu0 %v513
        %v1106 = vpop.f32.mrf.mxu0
        %v1107 = vadd.f32 %v422, %v1106
        %v1108 = vpop.f32.mrf.mxu0
        %1109 = vmatprep.mubr.f32.mxu0 0.0
        %1110 = vmatmul.mubr.f32.gmra.mxu0 %v516
        %v1111 = vpop.f32.mrf.mxu0
        %v1112 = vadd.f32 %v428, %v1111
        %v1113 = vpop.f32.mrf.mxu0
        %1114 = vdwg.mxu0
        %v1115 = vadd.f32 %v1107, %v1030
        %v1116 = vadd.f32 %v1112, %v1036
        %v1117 = vadd.f32 %v1115, %v599
        %v1118 = vadd.f32 %v1116, %v599
        %v1119 = vxor.u32 %v1117, 2147483648
        %v1120 = vxor.u32 %v1118, 2147483648
        %v1121 = vmul.f32 %v1119, 1.442695
        %v1122 = vpow.pop %v1121
        %v1123 = vmul.f32 %v1120, 1.442695
        %v1124 = vpow.pop %v1123
        %v1125 = vadd.f32 %v1122, 1.0
        %v1126 = vadd.f32 %v1124, 1.0
        %v1127 = vrcp.pop %v1125
        %v1128 = vmul.f32 1.0, %v1127
        %v1129 = vrcp.pop %v1126
        %v1130 = vmul.f32 1.0, %v1129
        %1131 = vst [vmem:[%s233 + $0x30] sm:$0xff] %v1128
        %1132 = vst [vmem:[%s233 + $0x38] sm:$0xff] %v1130
        %1133 = vst [vmem:[#allocation2] sm:$0xff] %v1128
        %1134 = vst [vmem:[#allocation2 + $0x8] sm:$0xff] %v1130
        %s1135 = sand.u32 %s138, 1
        %s1136 = scalar_lea.sflag [#allocation5], %s1135
        %s1137 = sand.u32 %s138, 1
        %s1138 = smul.addr %s1137, 64
        %s1139 = scalar_lea.vmem [#allocation6], %s1138
        // Predicated region
        $region49: #{tpu_custom_call.1} parent=39 // pred_check
          %p1140 = pneg %p148
        $region50: #{tpu_custom_call.1} parent=39 // pred_check_branch
          %1142 = sbr.rel (%p1140) target = $region52
        $region51: #{tpu_custom_call.1} parent=39 // pred_region
          %s1143 = smul.u32 8, %s20
          %s1145 = ssub.s32 1024, 1024
          %1146 = vsyncadd %s1136, %s1145
          %s1147 = smul.addr %s1143, 128
          %s1148 = scalar_lea.hbm %s5, %s1147
          %s1149 = sshll.u32 %s1139, 4
          %s1150 = int_to_ptr.vmem [resolvable:$true] %s1149
          %1155 = dma.vmem_to_hbm [thread:$0]  %s1150, 1024, %s1148, %s1136, 128, 128, 8
        $region52: #{tpu_custom_call.1} parent=39 // pred_fallthru
          _
      $region40: #{tpu_custom_call.1} parent=5 // pred_fallthru
        _
      %p1156 = scmp.le.s32.totalorder 2, %s15
      // Predicated region
      $region53: #{tpu_custom_call.1} parent=5 // pred_check
        %p1157 = pneg %p1156
      $region54: #{tpu_custom_call.1} parent=5 // pred_check_branch
        %1159 = sbr.rel (%p1157) target = $region56
      $region55: #{tpu_custom_call.1} parent=5 // pred_region
        %s1160 = ssub.s32 %s15, 2
        // Predicated region
        $region57: #{tpu_custom_call.1} parent=55 // pred_check
          %p1161 = pneg %p154
        $region58: #{tpu_custom_call.1} parent=55 // pred_check_branch
          %1163 = sbr.rel (%p1161) target = $region60
        $region59: #{tpu_custom_call.1} parent=55 // pred_region
          %s1164 = sand.u32 %s139, 1
          %s1165 = scalar_lea.sflag [#allocation5], %s1164
          %s1166 = sand.u32 %s139, 1
          %s1167 = smul.addr %s1166, 64
          %s1168 = scalar_lea.vmem [#allocation6], %s1167
          %1169 = dma.done %s1165, 1024
        $region60: #{tpu_custom_call.1} parent=55 // pred_fallthru
          _
      $region56: #{tpu_custom_call.1} parent=5 // pred_fallthru
        _
    $region6: #{tpu_custom_call.1} parent=1 // loop_footer
      %s19 = sadd.s32 1, %s15
    $region7: #{tpu_custom_call.1} parent=1 // loop_footer_branch
      %14 = sbr.rel target = $region3
    $region8: #{tpu_custom_call.1} parent=1 // loop_exit
      _
    %1170 = vsyncpa [#allocation4], 1
    %s1171 = scalar_lea.sflag [#allocation4], 1
    %1172 = vsyncpa %s1171, 1
    %1173 = vsyncpa [#allocation5], 1
    %s1174 = scalar_lea.sflag [#allocation5], 1
    %1175 = vsyncpa %s1174, 1

</llo_original>
